<compile_context>
chip_gen: v7x
topology: tpu7x:2x2x1
jax: 0.10.0
libtpu: 0.0.40
codegen_flags: <defaults>
</compile_context>

<pallas_src>
import jax
import jax.numpy as jnp
from jax.experimental import pallas as pl
from jax.experimental.pallas import tpu as pltpu

n_embd = 40           # matches the PyTorch module
hidden = 4 * n_embd   # 160

# Lane-aligned padded feature dims (fixed for this module).
C_PAD = 128           # 40  -> 128
H_PAD = 256           # 160 -> 256


def _round_up(x, m):
    return ((x + m - 1) // m) * m


def _ffn_kernel(x_ref, w1_ref, b1_ref, w2_ref, b2_ref, o_ref):
    # x_ref: (TM, Cp) bf16   w1_ref: (Cp, Hp) bf16   b1_ref: (1, Hp) f32
    # w2_ref: (Hp, Cp) bf16  b2_ref: (1, Cp) f32     o_ref: (TM, Cp) bf16
    x = x_ref[...]
    # First matmul on the MXU, f32 accumulation.
    h = jnp.dot(x, w1_ref[...], preferred_element_type=jnp.float32)
    # Bias (row broadcast) + ReLU stay in f32 (v5e has no bf16 VPU path).
    h = jnp.maximum(h + b1_ref[...], 0.0)
    # Single bf16 cast immediately before the second MXU matmul; f32 accumulate.
    y = jnp.dot(h.astype(jnp.bfloat16), w2_ref[...],
                preferred_element_type=jnp.float32)
    # Dropout(p=0.0) is identity -> nothing to do.
    # bf16 writeback: halves the HBM store traffic of the (mem-bound) kernel.
    o_ref[...] = (y + b2_ref[...]).astype(o_ref.dtype)


def init_params(key, c, h):
    """Deterministic init mimicking torch.nn.Linear defaults (uniform +-1/sqrt(fan_in)).

    Weights are stored transposed vs. torch: w1 (C, 4C), w2 (4C, C).
    """
    k1, k2, k3, k4 = jax.random.split(key, 4)
    bound1 = 1.0 / jnp.sqrt(c)
    bound2 = 1.0 / jnp.sqrt(h)
    w1 = jax.random.uniform(k1, (c, h), jnp.float32, -bound1, bound1)
    b1 = jax.random.uniform(k2, (1, h), jnp.float32, -bound1, bound1)
    w2 = jax.random.uniform(k3, (h, c), jnp.float32, -bound2, bound2)
    b2 = jax.random.uniform(k4, (1, c), jnp.float32, -bound2, bound2)
    return w1, b1, w2, b2


def prepare_params(w1, b1, w2, b2):
    """One-time pad + bf16 cast of the weights (hoisted out of the per-call path)."""
    C, H = w1.shape
    w1p = jnp.pad(w1, ((0, C_PAD - C), (0, H_PAD - H))).astype(jnp.bfloat16)
    w2p = jnp.pad(w2, ((0, H_PAD - H), (0, C_PAD - C))).astype(jnp.bfloat16)
    b1p = jnp.pad(b1.reshape(1, H), ((0, 0), (0, H_PAD - H))).astype(jnp.float32)
    b2p = jnp.pad(b2.reshape(1, C), ((0, 0), (0, C_PAD - C))).astype(jnp.float32)
    return w1p, b1p, w2p, b2p


def _ffn_padded(xp, w1p, b1p, w2p, b2p, *, tm):
    """Core kernel call: xp is (Np, Cp) bf16 with Np % tm == 0. Returns (Np, Cp) bf16.

    Callers that can keep activations in this padded bf16 layout should use this
    directly and avoid the pad/slice HBM passes of the convenience wrapper.
    """
    Np, Cp = xp.shape
    Hp = w1p.shape[1]
    num_tiles = Np // tm

    # Advisory cost estimate in *true* (unpadded) dims.
    flops = 2 * Np * (n_embd * hidden + hidden * n_embd)
    bytes_accessed = (Np * n_embd * 2                     # x read (bf16)
                      + n_embd * hidden * 2 + hidden * n_embd * 2   # weights (bf16)
                      + hidden * 4 + n_embd * 4           # biases (f32)
                      + Np * n_embd * 2)                  # out write (bf16)
    cost = pl.CostEstimate(flops=flops, transcendentals=0,
                           bytes_accessed=bytes_accessed)

    return pl.pallas_call(
        _ffn_kernel,
        out_shape=jax.ShapeDtypeStruct((Np, Cp), jnp.bfloat16),
        grid_spec=pltpu.PrefetchScalarGridSpec(
            num_scalar_prefetch=0,
            grid=(num_tiles,),
            in_specs=[
                pl.BlockSpec((tm, Cp), lambda i: (i, 0)),   # x   (row-tiled)
                pl.BlockSpec((Cp, Hp), lambda i: (0, 0)),   # w1  (VMEM-resident)
                pl.BlockSpec((1, Hp), lambda i: (0, 0)),    # b1  (resident)
                pl.BlockSpec((Hp, Cp), lambda i: (0, 0)),   # w2  (resident)
                pl.BlockSpec((1, Cp), lambda i: (0, 0)),    # b2  (resident)
            ],
            out_specs=pl.BlockSpec((tm, Cp), lambda i: (i, 0)),
        ),
        compiler_params=pltpu.CompilerParams(
            # Pure data-parallel over rows -> shard grid steps across TCs on v7x.
            dimension_semantics=("parallel",),
            # Usage at tm=1024 is a few MiB; explicit limit with ample headroom.
            vmem_limit_bytes=32 * 1024 * 1024,
        ),
        cost_estimate=cost,
    )(xp, w1p, b1p, w2p, b2p)


def feed_forward(x, params, *, tm=1024):
    """Convenience wrapper.  x: (B, T, C) f32, params from prepare_params().

    Returns (B, T, C) bf16 = relu(x @ w1 + b1) @ w2 + b2.
    """
    w1p, b1p, w2p, b2p = params
    B, T, C = x.shape
    N = B * T

    # Row tile: multiple of 16 (bf16 packing), and small enough that the grid has
    # >= 2 steps whenever N allows so both v7x TensorCores get work.
    tm = max(16, min(tm, _round_up(pl.cdiv(N, 2), 16)))
    Np = _round_up(N, tm)

    # Pad + cast the activation once here; padded rows are garbage and sliced off.
    # TODO(synk): for a real model, produce x already in (Np, C_PAD) bf16 and keep
    # the output padded for the consumer to avoid these extra HBM passes.
    xp = jnp.pad(x.reshape(N, C), ((0, Np - N), (0, C_PAD - C))).astype(jnp.bfloat16)

    out = _ffn_padded(xp, w1p, b1p, w2p, b2p, tm=tm)
    return out[:N, :C].reshape(B, T, C)


if __name__ == "__main__":
    key = jax.random.PRNGKey(0)
    kx, kp = jax.random.split(key)

    B, T = 2, 8
    x = jax.random.normal(kx, (B, T, n_embd), jnp.float32)
    w1, b1, w2, b2 = init_params(kp, n_embd, hidden)

    # One-time weight prep (padding + bf16 cast hoisted out of the forward path).
    params = prepare_params(w1, b1, w2, b2)

    y = feed_forward(x, params)
    jax.block_until_ready(y)

    # Pure-JAX f32 reference. Kernel operands and output are bf16 (f32 accumulate),
    # so compare with a tolerance covering bf16 rounding.
    x2d = x.reshape(-1, n_embd)
    ref = (jnp.maximum(x2d @ w1 + b1, 0.0) @ w2 + b2).reshape(B, T, n_embd)
    assert y.shape == (B, T, n_embd)
    assert jnp.allclose(y.astype(jnp.float32), ref, atol=5e-2, rtol=5e-2), (
        float(jnp.max(jnp.abs(y.astype(jnp.float32) - ref))))

    print("KERNEL_OK")
</pallas_src>

<mosaic_0001>
module attributes {stable_mosaic.version = 11 : i64} {
  func.func @_ffn_kernel(%arg0: i32, %arg1: memref<16x128xbf16, #tpu.memory_space<vmem>>, %arg2: memref<128x256xbf16, #tpu.memory_space<vmem>>, %arg3: memref<1x256xf32, #tpu.memory_space<vmem>>, %arg4: memref<256x128xbf16, #tpu.memory_space<vmem>>, %arg5: memref<1x128xf32, #tpu.memory_space<vmem>>, %arg6: memref<16x128xbf16, #tpu.memory_space<vmem>>) attributes {dimension_semantics = [#tpu.dimension_semantics<parallel>], iteration_bounds = array<i64: 1>, scalar_prefetch = 0 : i64, scratch_operands = 0 : i64, tpu.core_type = #tpu.core_type<tc>, window_params = [{transform_indices = @transform_0, window_bounds = array<i64: 16, 128>}, {pipeline_mode = #tpu.pipeline_mode<synchronous>, transform_indices = @transform_1, window_bounds = array<i64: 128, 256>}, {pipeline_mode = #tpu.pipeline_mode<synchronous>, transform_indices = @transform_2, window_bounds = array<i64: 1, 256>}, {pipeline_mode = #tpu.pipeline_mode<synchronous>, transform_indices = @transform_3, window_bounds = array<i64: 256, 128>}, {pipeline_mode = #tpu.pipeline_mode<synchronous>, transform_indices = @transform_4, window_bounds = array<i64: 1, 128>}, {transform_indices = @transform_5, window_bounds = array<i64: 16, 128>}]} {
    %c0 = arith.constant 0 : index
    %c0_0 = arith.constant 0 : index
    %0 = vector.load %arg1[%c0, %c0_0] : memref<16x128xbf16, #tpu.memory_space<vmem>>, vector<16x128xbf16>
    %c0_1 = arith.constant 0 : index
    %c0_2 = arith.constant 0 : index
    %1 = vector.load %arg2[%c0_1, %c0_2] : memref<128x256xbf16, #tpu.memory_space<vmem>>, vector<128x256xbf16>
    %cst = arith.constant dense<0.000000e+00> : vector<16x256xf32>
    %2 = tpu.matmul %0, %1, %cst {dimension_numbers = #tpu.dot_dimension_numbers<[1], [0], [0], [1], [0, 0, 1, 1], [], []>} : vector<16x128xbf16>, vector<128x256xbf16>, vector<16x256xf32> -> vector<16x256xf32>
    %c0_3 = arith.constant 0 : index
    %c0_4 = arith.constant 0 : index
    %3 = vector.load %arg3[%c0_3, %c0_4] : memref<1x256xf32, #tpu.memory_space<vmem>>, vector<1x256xf32>
    %4 = vector.broadcast %3 : vector<1x256xf32> to vector<16x256xf32>
    %5 = arith.addf %2, %4 : vector<16x256xf32>
    %cst_5 = arith.constant 0.000000e+00 : f32
    %6 = vector.broadcast %cst_5 : f32 to vector<16x256xf32>
    %7 = arith.maximumf %5, %6 : vector<16x256xf32>
    %8 = arith.truncf %7 : vector<16x256xf32> to vector<16x256xbf16>
    %c0_6 = arith.constant 0 : index
    %c0_7 = arith.constant 0 : index
    %9 = vector.load %arg4[%c0_6, %c0_7] : memref<256x128xbf16, #tpu.memory_space<vmem>>, vector<256x128xbf16>
    %cst_8 = arith.constant dense<0.000000e+00> : vector<16x128xf32>
    %10 = tpu.matmul %8, %9, %cst_8 {dimension_numbers = #tpu.dot_dimension_numbers<[1], [0], [0], [1], [0, 0, 1, 1], [], []>} : vector<16x256xbf16>, vector<256x128xbf16>, vector<16x128xf32> -> vector<16x128xf32>
    %c0_9 = arith.constant 0 : index
    %c0_10 = arith.constant 0 : index
    %11 = vector.load %arg5[%c0_9, %c0_10] : memref<1x128xf32, #tpu.memory_space<vmem>>, vector<1x128xf32>
    %12 = vector.broadcast %11 : vector<1x128xf32> to vector<16x128xf32>
    %13 = arith.addf %10, %12 : vector<16x128xf32>
    %14 = arith.truncf %13 : vector<16x128xf32> to vector<16x128xbf16>
    %c0_11 = arith.constant 0 : index
    %c0_12 = arith.constant 0 : index
    %15 = vector.load %arg6[%c0_11, %c0_12] : memref<16x128xbf16, #tpu.memory_space<vmem>>, vector<16x128xbf16>
    tpu.vector_store %arg6[%c0_11, %c0_12], %14 {strides = array<i32>} : memref<16x128xbf16, #tpu.memory_space<vmem>>, vector<16x128xbf16>,
    return
  }
  func.func @transform_0(%arg0: i32) -> (i32, i32) {
    %c0_i32 = arith.constant 0 : i32
    %c0_i32_0 = arith.constant 0 : i32
    return %arg0, %c0_i32 : i32, i32
  }
  func.func @transform_1(%arg0: i32) -> (i32, i32) {
    %c0_i32 = arith.constant 0 : i32
    %c0_i32_0 = arith.constant 0 : i32
    %c0_i32_1 = arith.constant 0 : i32
    return %c0_i32, %c0_i32_0 : i32, i32
  }
  func.func @transform_2(%arg0: i32) -> (i32, i32) {
    %c0_i32 = arith.constant 0 : i32
    %c0_i32_0 = arith.constant 0 : i32
    %c0_i32_1 = arith.constant 0 : i32
    return %c0_i32, %c0_i32_0 : i32, i32
  }
  func.func @transform_3(%arg0: i32) -> (i32, i32) {
    %c0_i32 = arith.constant 0 : i32
    %c0_i32_0 = arith.constant 0 : i32
    %c0_i32_1 = arith.constant 0 : i32
    return %c0_i32, %c0_i32_0 : i32, i32
  }
  func.func @transform_4(%arg0: i32) -> (i32, i32) {
    %c0_i32 = arith.constant 0 : i32
    %c0_i32_0 = arith.constant 0 : i32
    %c0_i32_1 = arith.constant 0 : i32
    return %c0_i32, %c0_i32_0 : i32, i32
  }
  func.func @transform_5(%arg0: i32) -> (i32, i32) {
    %c0_i32 = arith.constant 0 : i32
    %c0_i32_0 = arith.constant 0 : i32
    return %arg0, %c0_i32 : i32, i32
  }
}

</mosaic_0001>

<llo_original>
// kernel: tpu_custom_call.1
$region0: #{tpu_custom_call.1}
  #allocation0 [shape = 'u32[]', space=smem, size = 0x4, offset = 0x4, fixed_abs, tag = 'smem constant byte address 0x4 - core index']
  #allocation1 [shape = 'u32[144,128]{1,0:T(1,128)}', space=vmem, size = 0x12000, scoped, tag = 'internal scratch']
  %s0 = inlined_call_operand.hbm [shape: bf16[16,128], index: 0, kind: input, shape index: {}]
  %s1 = inlined_call_operand.hbm [shape: bf16[128,256], index: 1, kind: input, shape index: {}]
  %s2 = inlined_call_operand.vmem [shape: f32[1,256], index: 2, kind: input, shape index: {}]
  %s3 = inlined_call_operand.hbm [shape: bf16[256,128], index: 3, kind: input, shape index: {}]
  %s4 = inlined_call_operand.vmem [shape: f32[1,128], index: 4, kind: input, shape index: {}]
  %s5 = inlined_call_operand.hbm [shape: bf16[16,128], index: 5, kind: output, shape index: {}]
  %s6 = sld [smem:[#allocation0]]
  $region42: #{tpu_custom_call.1} parent=0
    _
  %s8 = ssub.s32 1, %s6
  %s9 = scalar_select 0, %s8, %s6
  $region1: #{tpu_custom_call.1} parent=0
    #allocation2 [shape = 'u8[4096]{0}', space=vmem, size = 0x1000, scoped, tag = 'input window, operand 0, single buffered']
    #allocation3 [shape = 's32[1]{0}', space=sflag, size = 0x4, scoped, tag = 'scoped memory for tpu_custom_call.1']
    #allocation4 [shape = 's32[1]{0}', space=sflag, size = 0x4, scoped, tag = 'scoped memory for tpu_custom_call.1']
    #allocation5 [shape = 'u8[65536]{0}', space=vmem, size = 0x10000, scoped, tag = 'input window, operand 1, single buffered']
    #allocation6 [shape = 's32[1]{0}', space=sflag, size = 0x4, scoped, tag = 'scoped memory for tpu_custom_call.1']
    #allocation7 [shape = 'u8[65536]{0}', space=vmem, size = 0x10000, scoped, tag = 'input window, operand 3, single buffered']
    #allocation8 [shape = 'u8[4096]{0}', space=vmem, size = 0x1000, scoped, tag = 'output window, operand 0, single buffered']
    %10 = vsyncpa [#allocation3], 0
    %11 = vsyncpa [#allocation6], 0
    %12 = vsyncpa [#allocation4], 0
    // Predicated region
    $region2: #{tpu_custom_call.1} parent=1 // pred_check
      _
    $region3: #{tpu_custom_call.1} parent=1 // pred_check_branch
      %14 = sbr.rel (0) target = $region5
    $region4: #{tpu_custom_call.1} parent=1 // pred_region
      %s16 = ssub.s32 128, 128
      %17 = vsyncadd [#allocation3], %s16
      %s18 = sshll.u32 [#allocation2], 4
      %s19 = int_to_ptr.vmem [resolvable:$true] %s18
      %24 = dma.hbm_to_vmem [thread:$0]  %s0, 128, %s19, [#allocation3], 64, 64, 4
    $region5: #{tpu_custom_call.1} parent=1 // pred_fallthru
      _
    // Predicated region
    $region6: #{tpu_custom_call.1} parent=1 // pred_check
      _
    $region7: #{tpu_custom_call.1} parent=1 // pred_check_branch
      %26 = sbr.rel (0) target = $region9
    $region8: #{tpu_custom_call.1} parent=1 // pred_region
      %s28 = ssub.s32 2048, 2048
      %29 = vsyncadd [#allocation6], %s28
      %s30 = sshll.u32 [#allocation5], 4
      %s31 = int_to_ptr.vmem [resolvable:$true] %s30
      %36 = dma.hbm_to_vmem [thread:$0]  %s1, 2048, %s31, [#allocation6], 128, 128, 8
    $region9: #{tpu_custom_call.1} parent=1 // pred_fallthru
      _
    // Predicated region
    $region10: #{tpu_custom_call.1} parent=1 // pred_check
      _
    $region11: #{tpu_custom_call.1} parent=1 // pred_check_branch
      %38 = sbr.rel (0) target = $region13
    $region12: #{tpu_custom_call.1} parent=1 // pred_region
      _
    $region13: #{tpu_custom_call.1} parent=1 // pred_fallthru
      _
    // Predicated region
    $region14: #{tpu_custom_call.1} parent=1 // pred_check
      _
    $region15: #{tpu_custom_call.1} parent=1 // pred_check_branch
      %40 = sbr.rel (0) target = $region17
    $region16: #{tpu_custom_call.1} parent=1 // pred_region
      %s42 = ssub.s32 2048, 2048
      %43 = vsyncadd [#allocation6], %s42
      %s44 = sshll.u32 [#allocation7], 4
      %s45 = int_to_ptr.vmem [resolvable:$true] %s44
      %50 = dma.hbm_to_vmem [thread:$0]  %s3, 2048, %s45, [#allocation6], 64, 64, 4
    $region17: #{tpu_custom_call.1} parent=1 // pred_fallthru
      _
    // Predicated region
    $region18: #{tpu_custom_call.1} parent=1 // pred_check
      _
    $region19: #{tpu_custom_call.1} parent=1 // pred_check_branch
      %52 = sbr.rel (0) target = $region21
    $region20: #{tpu_custom_call.1} parent=1 // pred_region
      _
    $region21: #{tpu_custom_call.1} parent=1 // pred_fallthru
      _
    // Predicated region
    $region22: #{tpu_custom_call.1} parent=1 // pred_check
      _
    $region23: #{tpu_custom_call.1} parent=1 // pred_check_branch
      %54 = sbr.rel (0) target = $region25
    $region24: #{tpu_custom_call.1} parent=1 // pred_region
      %55 = dma.done [#allocation3], 128
    $region25: #{tpu_custom_call.1} parent=1 // pred_fallthru
      _
    // Predicated region
    $region26: #{tpu_custom_call.1} parent=1 // pred_check
      _
    $region27: #{tpu_custom_call.1} parent=1 // pred_check_branch
      %57 = sbr.rel (0) target = $region29
    $region28: #{tpu_custom_call.1} parent=1 // pred_region
      %58 = dma.done [#allocation6], 2048
    $region29: #{tpu_custom_call.1} parent=1 // pred_fallthru
      _
    // Predicated region
    $region30: #{tpu_custom_call.1} parent=1 // pred_check
      _
    $region31: #{tpu_custom_call.1} parent=1 // pred_check_branch
      %60 = sbr.rel (0) target = $region33
    $region32: #{tpu_custom_call.1} parent=1 // pred_region
      %61 = dma.done [#allocation6], 2048
    $region33: #{tpu_custom_call.1} parent=1 // pred_fallthru
      _
    %v63 = vld [vmem:[#allocation2] sm:$0xf]
    %v64 = vld [vmem:[#allocation2 + $0x4] sm:$0xf]
    %v65 = vld [vmem:[#allocation5] sm:$0xff]
    %v66 = vld [vmem:[#allocation5 + $0x8] sm:$0xff]
    %v67 = vld [vmem:[#allocation5 + $0x10] sm:$0xff]
    %v68 = vld [vmem:[#allocation5 + $0x18] sm:$0xff]
    %v69 = vld [vmem:[#allocation5 + $0x20] sm:$0xff]
    %v70 = vld [vmem:[#allocation5 + $0x28] sm:$0xff]
    %v71 = vld [vmem:[#allocation5 + $0x30] sm:$0xff]
    %v72 = vld [vmem:[#allocation5 + $0x38] sm:$0xff]
    %v73 = vld [vmem:[#allocation5 + $0x40] sm:$0xff]
    %v74 = vld [vmem:[#allocation5 + $0x48] sm:$0xff]
    %v75 = vld [vmem:[#allocation5 + $0x50] sm:$0xff]
    %v76 = vld [vmem:[#allocation5 + $0x58] sm:$0xff]
    %v77 = vld [vmem:[#allocation5 + $0x60] sm:$0xff]
    %v78 = vld [vmem:[#allocation5 + $0x68] sm:$0xff]
    %v79 = vld [vmem:[#allocation5 + $0x70] sm:$0xff]
    %v80 = vld [vmem:[#allocation5 + $0x78] sm:$0xff]
    %v81 = vld [vmem:[%s2] sm:$0x3]
    %v83 = vlaneseq
    %v84 = vshrl.u32 %v83, 7
    %v85 = vsub.s32 0, %v84
    %v86 = vrot.slane %v81, %v85
    %v87 = vlaneseq
    %v88 = vshrl.u32 %v87, 7
    %v89 = vsub.s32 1, %v88
    %v90 = vrot.slane %v81, %v89
    %v95 = vunpack.c.l.b16 %v63
    %v96 = vunpack.c.l.b16 %v64
    %v97 = vpack.c.b16 %v96, %v95
    %v115 = vunpack.c.l.b16 %v65
    %v116 = vunpack.c.h.b16 %v65
    %v117 = vunpack.c.l.b16 %v66
    %v118 = vunpack.c.h.b16 %v66
    %v119 = vunpack.c.l.b16 %v67
    %v120 = vunpack.c.h.b16 %v67
    %v121 = vunpack.c.l.b16 %v68
    %v122 = vunpack.c.h.b16 %v68
    %v123 = vunpack.c.l.b16 %v69
    %v124 = vunpack.c.h.b16 %v69
    %v125 = vunpack.c.l.b16 %v70
    %v126 = vunpack.c.h.b16 %v70
    %v127 = vunpack.c.l.b16 %v71
    %v128 = vunpack.c.h.b16 %v71
    %v129 = vunpack.c.l.b16 %v72
    %v130 = vunpack.c.h.b16 %v72
    %v131 = vunpack.c.l.b16 %v73
    %v132 = vunpack.c.h.b16 %v73
    %v133 = vunpack.c.l.b16 %v74
    %v134 = vunpack.c.h.b16 %v74
    %v135 = vunpack.c.l.b16 %v75
    %v136 = vunpack.c.h.b16 %v75
    %v137 = vunpack.c.l.b16 %v76
    %v138 = vunpack.c.h.b16 %v76
    %v139 = vunpack.c.l.b16 %v77
    %v140 = vunpack.c.h.b16 %v77
    %v141 = vunpack.c.l.b16 %v78
    %v142 = vunpack.c.h.b16 %v78
    %v143 = vunpack.c.l.b16 %v79
    %v144 = vunpack.c.h.b16 %v79
    %v145 = vunpack.c.l.b16 %v80
    %v146 = vunpack.c.h.b16 %v80
    %v147 = vpack.c.b16 %v117, %v115
    %v148 = vpack.c.b16 %v118, %v116
    %v149 = vpack.c.b16 %v121, %v119
    %v150 = vpack.c.b16 %v122, %v120
    %v151 = vpack.c.b16 %v125, %v123
    %v152 = vpack.c.b16 %v126, %v124
    %v153 = vpack.c.b16 %v129, %v127
    %v154 = vpack.c.b16 %v130, %v128
    %v155 = vpack.c.b16 %v133, %v131
    %v156 = vpack.c.b16 %v134, %v132
    %v157 = vpack.c.b16 %v137, %v135
    %v158 = vpack.c.b16 %v138, %v136
    %v159 = vpack.c.b16 %v141, %v139
    %v160 = vpack.c.b16 %v142, %v140
    %v161 = vpack.c.b16 %v145, %v143
    %v162 = vpack.c.b16 %v146, %v144
    %179 = vmatprep.subr.bf16.mxu0 %v148
    %180 = vmatpush1.bf16.msra.mxu0 %v147
    %181 = vmatprep.subr.bf16.mxu0 %v150
    %182 = vmatpush1.bf16.msra.mxu0 %v149
    %183 = vmatprep.subr.bf16.mxu0 %v152
    %184 = vmatpush1.bf16.msra.mxu0 %v151
    %185 = vmatprep.subr.bf16.mxu0 %v154
    %186 = vmatpush1.bf16.msra.mxu0 %v153
    %187 = vmatprep.subr.bf16.mxu0 %v156
    %188 = vmatpush1.bf16.msra.mxu0 %v155
    %189 = vmatprep.subr.bf16.mxu0 %v158
    %190 = vmatpush1.bf16.msra.mxu0 %v157
    %191 = vmatprep.subr.bf16.mxu0 %v160
    %192 = vmatpush1.bf16.msra.mxu0 %v159
    %193 = vmatprep.subr.bf16.mxu0 %v162
    %194 = vmatpush1.bf16.msra.mxu0 %v161
    %195 = vmatprep.subr.bf16.mxu0 0
    %196 = vmatpush1.bf16.msra.mxu0 0
    %197 = vmatprep.subr.bf16.mxu0 0
    %198 = vmatpush1.bf16.msra.mxu0 0
    %199 = vmatprep.subr.bf16.mxu0 0
    %200 = vmatpush1.bf16.msra.mxu0 0
    %201 = vmatprep.subr.bf16.mxu0 0
    %202 = vmatpush1.bf16.msra.mxu0 0
    %203 = vmatprep.subr.bf16.mxu0 0
    %204 = vmatpush1.bf16.msra.mxu0 0
    %205 = vmatprep.subr.bf16.mxu0 0
    %206 = vmatpush1.bf16.msra.mxu0 0
    %207 = vmatprep.subr.bf16.mxu0 0
    %208 = vmatpush1.bf16.msra.mxu0 0
    %209 = vmatprep.subr.bf16.mxu0 0
    %210 = vmatpush1.bf16.msra.mxu0 0
    %211 = vmatprep.mubr.bf16.mxu0 0
    %212 = vmatmul.mubr.bf16.gmra.mrb[0].mxu0 %v97
    %v213 = vpop.f32.mrb[0].mxu0
    %v214 = vadd.f32 %v86, %v213
    %v215 = vpop.f32.mrb[0].mxu0
    %v216 = vadd.f32 %v90, %v215
    %v217 = vpop.f32.mrb[0].mxu0
    %v218 = vadd.f32 %v86, %v217
    %v219 = vpop.f32.mrb[0].mxu0
    %v220 = vadd.f32 %v90, %v219
    %221 = vdwg.mxu0
    %v222 = vmax.f32 %v214, 0.0
    %v223 = vmax.f32 %v216, 0.0
    %v224 = vmax.f32 %v218, 0.0
    %v225 = vmax.f32 %v220, 0.0
    %v226 = vpack.c.bf16 %v224, %v222
    %v227 = vpack.c.bf16 %v225, %v223
    %v228 = vld [vmem:[#allocation7] sm:$0xf]
    %v229 = vld [vmem:[#allocation7 + $0x4] sm:$0xf]
    %v230 = vld [vmem:[#allocation7 + $0x8] sm:$0xf]
    %v231 = vld [vmem:[#allocation7 + $0xc] sm:$0xf]
    %v232 = vld [vmem:[#allocation7 + $0x10] sm:$0xf]
    %v233 = vld [vmem:[#allocation7 + $0x14] sm:$0xf]
    %v234 = vld [vmem:[#allocation7 + $0x18] sm:$0xf]
    %v235 = vld [vmem:[#allocation7 + $0x1c] sm:$0xf]
    %v236 = vld [vmem:[#allocation7 + $0x20] sm:$0xf]
    %v237 = vld [vmem:[#allocation7 + $0x24] sm:$0xf]
    %v238 = vld [vmem:[#allocation7 + $0x28] sm:$0xf]
    %v239 = vld [vmem:[#allocation7 + $0x2c] sm:$0xf]
    %v240 = vld [vmem:[#allocation7 + $0x30] sm:$0xf]
    %v241 = vld [vmem:[#allocation7 + $0x34] sm:$0xf]
    %v242 = vld [vmem:[#allocation7 + $0x38] sm:$0xf]
    %v243 = vld [vmem:[#allocation7 + $0x3c] sm:$0xf]
    %v244 = vld [vmem:[#allocation7 + $0x40] sm:$0xf]
    %v245 = vld [vmem:[#allocation7 + $0x44] sm:$0xf]
    %v246 = vld [vmem:[#allocation7 + $0x48] sm:$0xf]
    %v247 = vld [vmem:[#allocation7 + $0x4c] sm:$0xf]
    %v248 = vld [vmem:[#allocation7 + $0x50] sm:$0xf]
    %v249 = vld [vmem:[#allocation7 + $0x54] sm:$0xf]
    %v250 = vld [vmem:[#allocation7 + $0x58] sm:$0xf]
    %v251 = vld [vmem:[#allocation7 + $0x5c] sm:$0xf]
    %v252 = vld [vmem:[#allocation7 + $0x60] sm:$0xf]
    %v253 = vld [vmem:[#allocation7 + $0x64] sm:$0xf]
    %v254 = vld [vmem:[#allocation7 + $0x68] sm:$0xf]
    %v255 = vld [vmem:[#allocation7 + $0x6c] sm:$0xf]
    %v256 = vld [vmem:[#allocation7 + $0x70] sm:$0xf]
    %v257 = vld [vmem:[#allocation7 + $0x74] sm:$0xf]
    %v258 = vld [vmem:[#allocation7 + $0x78] sm:$0xf]
    %v259 = vld [vmem:[#allocation7 + $0x7c] sm:$0xf]
    %v260 = vld [vmem:[%s4] sm:$0x1]
    %v262 = vlaneseq
    %v263 = vshrl.u32 %v262, 7
    %v264 = vsub.s32 0, %v263
    %v265 = vrot.slane %v260, %v264
    %v299 = vunpack.c.l.b16 %v228
    %v300 = vunpack.c.l.b16 %v229
    %v301 = vunpack.c.l.b16 %v230
    %v302 = vunpack.c.l.b16 %v231
    %v303 = vunpack.c.l.b16 %v232
    %v304 = vunpack.c.l.b16 %v233
    %v305 = vunpack.c.l.b16 %v234
    %v306 = vunpack.c.l.b16 %v235
    %v307 = vunpack.c.l.b16 %v236
    %v308 = vunpack.c.l.b16 %v237
    %v309 = vunpack.c.l.b16 %v238
    %v310 = vunpack.c.l.b16 %v239
    %v311 = vunpack.c.l.b16 %v240
    %v312 = vunpack.c.l.b16 %v241
    %v313 = vunpack.c.l.b16 %v242
    %v314 = vunpack.c.l.b16 %v243
    %v315 = vunpack.c.l.b16 %v244
    %v316 = vunpack.c.l.b16 %v245
    %v317 = vunpack.c.l.b16 %v246
    %v318 = vunpack.c.l.b16 %v247
    %v319 = vunpack.c.l.b16 %v248
    %v320 = vunpack.c.l.b16 %v249
    %v321 = vunpack.c.l.b16 %v250
    %v322 = vunpack.c.l.b16 %v251
    %v323 = vunpack.c.l.b16 %v252
    %v324 = vunpack.c.l.b16 %v253
    %v325 = vunpack.c.l.b16 %v254
    %v326 = vunpack.c.l.b16 %v255
    %v327 = vunpack.c.l.b16 %v256
    %v328 = vunpack.c.l.b16 %v257
    %v329 = vunpack.c.l.b16 %v258
    %v330 = vunpack.c.l.b16 %v259
    %v331 = vpack.c.b16 %v300, %v299
    %v332 = vpack.c.b16 %v302, %v301
    %v333 = vpack.c.b16 %v304, %v303
    %v334 = vpack.c.b16 %v306, %v305
    %v335 = vpack.c.b16 %v308, %v307
    %v336 = vpack.c.b16 %v310, %v309
    %v337 = vpack.c.b16 %v312, %v311
    %v338 = vpack.c.b16 %v314, %v313
    %v339 = vpack.c.b16 %v316, %v315
    %v340 = vpack.c.b16 %v318, %v317
    %v341 = vpack.c.b16 %v320, %v319
    %v342 = vpack.c.b16 %v322, %v321
    %v343 = vpack.c.b16 %v324, %v323
    %v344 = vpack.c.b16 %v326, %v325
    %v345 = vpack.c.b16 %v328, %v327
    %v346 = vpack.c.b16 %v330, %v329
    %363 = vmatprep.subr.bf16.mxu0 0
    %364 = vmatpush1.bf16.msra.mxu0 %v331
    %365 = vmatprep.subr.bf16.mxu0 0
    %366 = vmatpush1.bf16.msra.mxu0 %v332
    %367 = vmatprep.subr.bf16.mxu0 0
    %368 = vmatpush1.bf16.msra.mxu0 %v333
    %369 = vmatprep.subr.bf16.mxu0 0
    %370 = vmatpush1.bf16.msra.mxu0 %v334
    %371 = vmatprep.subr.bf16.mxu0 0
    %372 = vmatpush1.bf16.msra.mxu0 %v335
    %373 = vmatprep.subr.bf16.mxu0 0
    %374 = vmatpush1.bf16.msra.mxu0 %v336
    %375 = vmatprep.subr.bf16.mxu0 0
    %376 = vmatpush1.bf16.msra.mxu0 %v337
    %377 = vmatprep.subr.bf16.mxu0 0
    %378 = vmatpush1.bf16.msra.mxu0 %v338
    %379 = vmatprep.subr.bf16.mxu0 0
    %380 = vmatpush1.bf16.msra.mxu0 %v339
    %381 = vmatprep.subr.bf16.mxu0 0
    %382 = vmatpush1.bf16.msra.mxu0 %v340
    %383 = vmatprep.subr.bf16.mxu0 0
    %384 = vmatpush1.bf16.msra.mxu0 %v341
    %385 = vmatprep.subr.bf16.mxu0 0
    %386 = vmatpush1.bf16.msra.mxu0 %v342
    %387 = vmatprep.subr.bf16.mxu0 0
    %388 = vmatpush1.bf16.msra.mxu0 %v343
    %389 = vmatprep.subr.bf16.mxu0 0
    %390 = vmatpush1.bf16.msra.mxu0 %v344
    %391 = vmatprep.subr.bf16.mxu0 0
    %392 = vmatpush1.bf16.msra.mxu0 %v345
    %393 = vmatprep.subr.bf16.mxu0 0
    %394 = vmatpush1.bf16.msra.mxu0 %v346
    %395 = vmatprep.mubr.bf16.mxu0 %v227
    %396 = vmatmul.mubr.bf16.gmra.mrb[0].mxu0 %v226
    %v397 = vpop.f32.mrb[0].mxu0
    %v398 = vadd.f32 %v265, %v397
    %v399 = vpop.f32.mrb[0].mxu0
    %v400 = vpop.f32.mrb[0].mxu0
    %v401 = vadd.f32 %v265, %v400
    %v402 = vpop.f32.mrb[0].mxu0
    %403 = vdwg.mxu0
    %v404 = vpack.c.bf16 %v401, %v398
    %v406 = vunpack.c.l.b16 %v404
    %v407 = vunpack.c.h.b16 %v404
    %v408 = vpack.c.b16 %v406, %v406
    %v409 = vpack.c.b16 %v407, %v407
    %412 = vst [vmem:[#allocation8] sm:$0xf] %v408
    %413 = vst [vmem:[#allocation8 + $0x4] sm:$0xf] %v409
    // Predicated region
    $region34: #{tpu_custom_call.1} parent=1 // pred_check
      _
    $region35: #{tpu_custom_call.1} parent=1 // pred_check_branch
      %415 = sbr.rel (0) target = $region37
    $region36: #{tpu_custom_call.1} parent=1 // pred_region
      %s417 = ssub.s32 128, 128
      %418 = vsyncadd [#allocation4], %s417
      %s419 = sshll.u32 [#allocation8], 4
      %s420 = int_to_ptr.vmem [resolvable:$true] %s419
      %425 = dma.vmem_to_hbm [thread:$0]  %s420, 128, %s5, [#allocation4], 64, 64, 4
    $region37: #{tpu_custom_call.1} parent=1 // pred_fallthru
      _
    // Predicated region
    $region38: #{tpu_custom_call.1} parent=1 // pred_check
      _
    $region39: #{tpu_custom_call.1} parent=1 // pred_check_branch
      %427 = sbr.rel (0) target = $region41
    $region40: #{tpu_custom_call.1} parent=1 // pred_region
      %428 = dma.done [#allocation4], 128
    $region41: #{tpu_custom_call.1} parent=1 // pred_fallthru
      _
    %429 = vsyncpa [#allocation3], 1
    %430 = vsyncpa [#allocation6], 1
    %431 = vsyncpa [#allocation4], 1

</llo_original>
